<compile_context>
chip_gen: v7x
topology: tpu7x:2x2x1
jax: 0.10.0
libtpu: 0.0.40
codegen_flags: <defaults>
</compile_context>

<pallas_src>
import jax
import jax.numpy as jnp
import numpy as np
from jax.experimental import pallas as pl
from jax.experimental.pallas import tpu as pltpu


def _frozen_bn_kernel(x_ref, scale_ref, bias_ref, o_ref):
    # x_ref:     (1, C_t, HW_t) tile of the input
    # scale_ref: (C_t, 1) precomputed per-channel scale (f32)
    # bias_ref:  (C_t, 1) precomputed per-channel bias  (f32)
    scale = scale_ref[...]                                  # (C_t, 1)
    bias = bias_ref[...]                                    # (C_t, 1)
    x = x_ref[...].astype(jnp.float32)                      # (1, C_t, HW_t)
    y = x * scale[None] + bias[None]                        # fused multiply-add
    o_ref[...] = y.astype(o_ref.dtype)


def _pick_tile(dim, base, cap):
    """Largest divisor of `dim` that is a multiple of `base` and <= cap.

    Falls back to the full dimension if `dim` is not a multiple of `base`
    (a full-extent block is always legal regardless of the (8,128) rule).
    """
    if dim <= 0 or dim % base != 0:
        return dim
    best = base
    t = base
    limit = min(dim, cap)
    while t <= limit:
        if dim % t == 0:
            best = t
        t += base
    return best


def frozen_batch_norm_2d(x, weight, bias, running_mean, running_var, eps=1e-5):
    """x: (N, C, H, W) float array; params: (C,) float arrays."""
    n, c, h, w = x.shape
    hw = h * w
    x_flat = x.reshape(n, c, hw)

    # Precompute the per-channel affine in f32 (matches PyTorch math exactly).
    f32 = jnp.float32
    scale = weight.astype(f32) * jax.lax.rsqrt(running_var.astype(f32) + f32(eps))
    shift = bias.astype(f32) - running_mean.astype(f32) * scale
    scale2 = scale.reshape(c, 1)
    shift2 = shift.reshape(c, 1)

    # Tile sizes: channel tile multiple of 8 (<=256), spatial tile multiple of
    # 128 (<=2048).  Max block 256*2048*4B = 2 MiB -> ~8 MiB double-buffered
    # in+out, safe on every generation's scoped VMEM default.
    c_t = _pick_tile(c, 8, 256)
    hw_t = _pick_tile(hw, 128, 2048)

    grid = (n, c // c_t, hw // hw_t)

    x_spec = pl.BlockSpec((1, c_t, hw_t), lambda ni, ci, hi: (ni, ci, hi))
    param_spec = pl.BlockSpec((c_t, 1), lambda ni, ci, hi: (ci, 0))

    out = pl.pallas_call(
        _frozen_bn_kernel,
        out_shape=jax.ShapeDtypeStruct((n, c, hw), x.dtype),
        grid_spec=pltpu.PrefetchScalarGridSpec(
            num_scalar_prefetch=0,
            grid=grid,
            in_specs=[
                x_spec,       # x tile
                param_spec,   # precomputed scale
                param_spec,   # precomputed bias
            ],
            out_specs=pl.BlockSpec((1, c_t, hw_t), lambda ni, ci, hi: (ni, ci, hi)),
        ),
        compiler_params=pltpu.CompilerParams(
            dimension_semantics=("parallel", "parallel", "parallel"),
        ),
    )(x_flat, scale2, shift2)

    return out.reshape(n, c, h, w)


if __name__ == "__main__":
    key = jax.random.PRNGKey(0)
    N, C, H, W = 2, 4, 16, 16
    eps = 1e-5

    kx, kw, kb, km, kv = jax.random.split(key, 5)
    x = jax.random.normal(kx, (N, C, H, W), dtype=jnp.float32)

    # Deterministic "frozen" buffers (module init shapes: all (C,)).
    weight = jnp.ones((C,), jnp.float32) + 0.1 * jax.random.normal(kw, (C,))
    bias = 0.1 * jax.random.normal(kb, (C,))
    running_mean = 0.1 * jax.random.normal(km, (C,))
    running_var = jnp.ones((C,), jnp.float32) + 0.1 * jnp.abs(
        jax.random.normal(kv, (C,))
    )

    y = frozen_batch_norm_2d(x, weight, bias, running_mean, running_var, eps)
    y = jax.block_until_ready(y)

    # Pure-JAX reference check (mirrors the PyTorch forward exactly).
    scale_ref = weight.reshape(1, C, 1, 1) * jax.lax.rsqrt(
        running_var.reshape(1, C, 1, 1) + eps
    )
    b_ref = bias.reshape(1, C, 1, 1) - running_mean.reshape(1, C, 1, 1) * scale_ref
    y_ref = x * scale_ref + b_ref
    np.testing.assert_allclose(np.asarray(y), np.asarray(y_ref), rtol=1e-6, atol=1e-6)

    print("KERNEL_OK")
</pallas_src>

<mosaic_0001>
module attributes {stable_mosaic.version = 11 : i64} {
  func.func @_frozen_bn_kernel(%arg0: i32, %arg1: i32, %arg2: i32, %arg3: memref<1x4x256xf32, #tpu.memory_space<vmem>>, %arg4: memref<4x1xf32, #tpu.memory_space<vmem>>, %arg5: memref<4x1xf32, #tpu.memory_space<vmem>>, %arg6: memref<1x4x256xf32, #tpu.memory_space<vmem>>) attributes {dimension_semantics = [#tpu.dimension_semantics<parallel>, #tpu.dimension_semantics<parallel>, #tpu.dimension_semantics<parallel>], iteration_bounds = array<i64: 2, 1, 1>, scalar_prefetch = 0 : i64, scratch_operands = 0 : i64, tpu.core_type = #tpu.core_type<tc>, window_params = [{transform_indices = @transform_0, window_bounds = array<i64: 1, 4, 256>}, {transform_indices = @transform_1, window_bounds = array<i64: 4, 1>}, {transform_indices = @transform_2, window_bounds = array<i64: 4, 1>}, {transform_indices = @transform_3, window_bounds = array<i64: 1, 4, 256>}]} {
    %c0 = arith.constant 0 : index
    %c0_0 = arith.constant 0 : index
    %0 = vector.load %arg4[%c0, %c0_0] : memref<4x1xf32, #tpu.memory_space<vmem>>, vector<4x1xf32>
    %c0_1 = arith.constant 0 : index
    %c0_2 = arith.constant 0 : index
    %1 = vector.load %arg5[%c0_1, %c0_2] : memref<4x1xf32, #tpu.memory_space<vmem>>, vector<4x1xf32>
    %c0_3 = arith.constant 0 : index
    %c0_4 = arith.constant 0 : index
    %c0_5 = arith.constant 0 : index
    %2 = vector.load %arg3[%c0_3, %c0_4, %c0_5] : memref<1x4x256xf32, #tpu.memory_space<vmem>>, vector<1x4x256xf32>
    %3 = vector.shape_cast %0 : vector<4x1xf32> to vector<1x4x1xf32>
    %4 = vector.broadcast %3 : vector<1x4x1xf32> to vector<1x4x256xf32>
    %5 = arith.mulf %2, %4 : vector<1x4x256xf32>
    %6 = vector.shape_cast %1 : vector<4x1xf32> to vector<1x4x1xf32>
    %7 = vector.broadcast %6 : vector<1x4x1xf32> to vector<1x4x256xf32>
    %8 = arith.addf %5, %7 : vector<1x4x256xf32>
    %c0_6 = arith.constant 0 : index
    %c0_7 = arith.constant 0 : index
    %c0_8 = arith.constant 0 : index
    %9 = vector.load %arg6[%c0_6, %c0_7, %c0_8] : memref<1x4x256xf32, #tpu.memory_space<vmem>>, vector<1x4x256xf32>
    tpu.vector_store %arg6[%c0_6, %c0_7, %c0_8], %8 {strides = array<i32>} : memref<1x4x256xf32, #tpu.memory_space<vmem>>, vector<1x4x256xf32>,
    return
  }
  func.func @transform_0(%arg0: i32, %arg1: i32, %arg2: i32) -> (i32, i32, i32) {
    %c0_i32 = arith.constant 0 : i32
    return %arg0, %arg1, %arg2 : i32, i32, i32
  }
  func.func @transform_1(%arg0: i32, %arg1: i32, %arg2: i32) -> (i32, i32) {
    %c0_i32 = arith.constant 0 : i32
    %c0_i32_0 = arith.constant 0 : i32
    return %arg1, %c0_i32 : i32, i32
  }
  func.func @transform_2(%arg0: i32, %arg1: i32, %arg2: i32) -> (i32, i32) {
    %c0_i32 = arith.constant 0 : i32
    %c0_i32_0 = arith.constant 0 : i32
    return %arg1, %c0_i32 : i32, i32
  }
  func.func @transform_3(%arg0: i32, %arg1: i32, %arg2: i32) -> (i32, i32, i32) {
    %c0_i32 = arith.constant 0 : i32
    return %arg0, %arg1, %arg2 : i32, i32, i32
  }
}

</mosaic_0001>

<llo_original>
// kernel: tpu_custom_call.1
$region0: #{tpu_custom_call.1}
  #allocation0 [shape = 'u32[]', space=smem, size = 0x4, offset = 0x4, fixed_abs, tag = 'smem constant byte address 0x4 - core index']
  #allocation1 [shape = 'u32[144,128]{1,0:T(1,128)}', space=vmem, size = 0x12000, scoped, tag = 'internal scratch']
  %s0 = inlined_call_operand.hbm [shape: f32[2,4,256], index: 0, kind: input, shape index: {}]
  %s1 = inlined_call_operand.vmem [shape: f32[4,1], index: 1, kind: input, shape index: {}]
  %s2 = inlined_call_operand.vmem [shape: f32[4,1], index: 2, kind: input, shape index: {}]
  %s3 = inlined_call_operand.hbm [shape: f32[2,4,256], index: 3, kind: output, shape index: {}]
  %s4 = sld [smem:[#allocation0]]
  $region49: #{tpu_custom_call.1} parent=0
    _
  %s6 = ssub.s32 1, %s4
  %s7 = scalar_select 0, %s6, %s4
  $region1: #{tpu_custom_call.1} parent=0
    #allocation2 [shape = 'u8[8192]{0}', space=vmem, size = 0x2000, scoped, tag = 'input window, operand 0']
    #allocation3 [shape = 's32[2]{0}', space=sflag, size = 0x8, scoped, tag = 'scoped memory for tpu_custom_call.1']
    #allocation4 [shape = 's32[2]{0}', space=sflag, size = 0x8, scoped, tag = 'scoped memory for tpu_custom_call.1']
    #allocation5 [shape = 'u8[8192]{0}', space=vmem, size = 0x2000, scoped, tag = 'output window, operand 0']
    %8 = vsyncpa [#allocation3], 0
    %s9 = scalar_lea.sflag [#allocation3], 1
    %10 = vsyncpa %s9, 0
    %11 = vsyncpa [#allocation4], 0
    %s12 = scalar_lea.sflag [#allocation4], 1
    %13 = vsyncpa %s12, 0
    loop: start=0, step=1, limit=4
    $region2: #{tpu_custom_call.1} parent=1 // loop_pre_header
      _
    $region3: #{tpu_custom_call.1} parent=1 // loop_header
      %s15 = sphi 0, %s19
      %p16 = scmp.ge.s32.totalorder %s15, 4
      %s22 = sphi 0, %s41
      %s23 = sphi 0, %s37
      %s24 = sphi 0, %s33
      %s25 = sphi 0, %s22
      %s26 = sphi 0, %s23
      %s27 = sphi 0, %s24
      %s28 = sphi 0, %s25
      %s29 = sphi 0, %s26
      %s30 = sphi 0, %s27
      %s48 = sphi 0, %s50
      %s51 = sphi 0, %s48
      %s52 = sphi 0, %s51
      %s68 = sphi 0, %s52
      %s74 = sphi 0, %s76
      %s77 = sphi 0, %s74
      %s78 = sphi 0, %s77
      %s94 = sphi 0, %s78
      %s100 = sphi 0, %s102
      %s103 = sphi 0, %s100
      %s104 = sphi 0, %s103
      %s120 = sphi 0, %s104
      %s130 = sphi 0, %s132
      %s133 = sphi 0, %s130
      %s134 = sphi 0, %s133
      %s150 = sphi 0, %s134
    $region4: #{tpu_custom_call.1} parent=1 // loop_header_branch
      %18 = sbr.rel (%p16) target = $region8
    $region5: #{tpu_custom_call.1} parent=1 // loop_body
      %s20 = ssub.s32 %s15, 1
      %s21 = ssub.s32 %s15, 2
      %s31 = sadd.s32 1, %s24
      %p32 = scmp.ge.s32.totalorder %s31, 1
      %s33 = scalar_select %p32, 0, %s31
      %s34 = sadd.s32 1, %s23
      %s35 = scalar_select %p32, %s34, %s23
      %p36 = scmp.ge.s32.totalorder %s35, 1
      %s37 = scalar_select %p36, 0, %s35
      %s38 = sadd.s32 1, %s22
      %s39 = scalar_select %p36, %s38, %s22
      %p40 = scmp.ge.s32.totalorder %s39, 2
      %s41 = scalar_select %p40, 0, %s39
      %s42 = ssub.s32 %s22, %s41
      %s43 = ssub.s32 %s23, %s37
      %s44 = sor.u32 %s42, %s43
      %s45 = ssub.s32 %s24, %s33
      %s46 = sor.u32 %s44, %s45
      %p47 = scmp.eq.s32.totalorder %s46, 0
      %s49 = sadd.s32 %s48, 1
      %s50 = scalar_select %p47, %s48, %s49
      %p53 = pneg %p47
      %p54 = scmp.eq.s32.totalorder %s15, 1
      %p55 = por %p53, %p54
      %p56 = scmp.ne.s32.totalorder %s48, %s51
      %p57 = scmp.eq.s32.totalorder %s15, 0
      %p58 = por %p56, %p57
      %p59 = scmp.ne.s32.totalorder %s48, %s51
      %p60 = scmp.eq.s32.totalorder %s20, 1
      %p61 = por %p59, %p60
      %p62 = scmp.ne.s32.totalorder %s51, %s52
      %p63 = scmp.eq.s32.totalorder %s20, 0
      %p64 = por %p62, %p63
      %p65 = scmp.ne.s32.totalorder %s51, %s52
      %p66 = scmp.eq.s32.totalorder %s21, 1
      %p67 = por %p65, %p66
      %p69 = scmp.ne.s32.totalorder %s52, %s68
      %p70 = scmp.eq.s32.totalorder %s21, 0
      %p71 = por %p69, %p70
      %s72 = ssub.s32 %s23, %s37
      %p73 = scmp.eq.s32.totalorder %s72, 0
      %s75 = sadd.s32 %s74, 1
      %s76 = scalar_select %p73, %s74, %s75
      %p79 = pneg %p73
      %p80 = scmp.eq.s32.totalorder %s15, 1
      %p81 = por %p79, %p80
      %p82 = scmp.ne.s32.totalorder %s74, %s77
      %p83 = scmp.eq.s32.totalorder %s15, 0
      %p84 = por %p82, %p83
      %p85 = scmp.ne.s32.totalorder %s74, %s77
      %p86 = scmp.eq.s32.totalorder %s20, 1
      %p87 = por %p85, %p86
      %p88 = scmp.ne.s32.totalorder %s77, %s78
      %p89 = scmp.eq.s32.totalorder %s20, 0
      %p90 = por %p88, %p89
      %p91 = scmp.ne.s32.totalorder %s77, %s78
      %p92 = scmp.eq.s32.totalorder %s21, 1
      %p93 = por %p91, %p92
      %p95 = scmp.ne.s32.totalorder %s78, %s94
      %p96 = scmp.eq.s32.totalorder %s21, 0
      %p97 = por %p95, %p96
      %s98 = ssub.s32 %s23, %s37
      %p99 = scmp.eq.s32.totalorder %s98, 0
      %s101 = sadd.s32 %s100, 1
      %s102 = scalar_select %p99, %s100, %s101
      %p105 = pneg %p99
      %p106 = scmp.eq.s32.totalorder %s15, 1
      %p107 = por %p105, %p106
      %p108 = scmp.ne.s32.totalorder %s100, %s103
      %p109 = scmp.eq.s32.totalorder %s15, 0
      %p110 = por %p108, %p109
      %p111 = scmp.ne.s32.totalorder %s100, %s103
      %p112 = scmp.eq.s32.totalorder %s20, 1
      %p113 = por %p111, %p112
      %p114 = scmp.ne.s32.totalorder %s103, %s104
      %p115 = scmp.eq.s32.totalorder %s20, 0
      %p116 = por %p114, %p115
      %p117 = scmp.ne.s32.totalorder %s103, %s104
      %p118 = scmp.eq.s32.totalorder %s21, 1
      %p119 = por %p117, %p118
      %p121 = scmp.ne.s32.totalorder %s104, %s120
      %p122 = scmp.eq.s32.totalorder %s21, 0
      %p123 = por %p121, %p122
      %s124 = ssub.s32 %s22, %s41
      %s125 = ssub.s32 %s23, %s37
      %s126 = sor.u32 %s124, %s125
      %s127 = ssub.s32 %s24, %s33
      %s128 = sor.u32 %s126, %s127
      %p129 = scmp.eq.s32.totalorder %s128, 0
      %s131 = sadd.s32 %s130, 1
      %s132 = scalar_select %p129, %s130, %s131
      %p135 = pneg %p129
      %p136 = scmp.eq.s32.totalorder %s15, 1
      %p137 = por %p135, %p136
      %p138 = scmp.ne.s32.totalorder %s130, %s133
      %p139 = scmp.eq.s32.totalorder %s15, 0
      %p140 = por %p138, %p139
      %p141 = scmp.ne.s32.totalorder %s130, %s133
      %p142 = scmp.eq.s32.totalorder %s20, 1
      %p143 = por %p141, %p142
      %p144 = scmp.ne.s32.totalorder %s133, %s134
      %p145 = scmp.eq.s32.totalorder %s20, 0
      %p146 = por %p144, %p145
      %p147 = scmp.ne.s32.totalorder %s133, %s134
      %p148 = scmp.eq.s32.totalorder %s21, 1
      %p149 = por %p147, %p148
      %p151 = scmp.ne.s32.totalorder %s134, %s150
      %p152 = scmp.eq.s32.totalorder %s21, 0
      %p153 = por %p151, %p152
      %p154 = scmp.le.s32.totalorder 1, %s15
      %p155 = scmp.lt.s32.totalorder %s15, 3
      %p156 = pnand %p154, %p155
      %p157 = pneg %p156
      // Predicated region
      $region9: #{tpu_custom_call.1} parent=5 // pred_check
        _
      $region10: #{tpu_custom_call.1} parent=5 // pred_check_branch
        %159 = sbr.rel (%p156) target = $region12
      $region11: #{tpu_custom_call.1} parent=5 // pred_region
        %s160 = ssub.s32 %s15, 1
        // Predicated region
        $region13: #{tpu_custom_call.1} parent=11 // pred_check
          %p161 = pneg %p90
        $region14: #{tpu_custom_call.1} parent=11 // pred_check_branch
          %163 = sbr.rel (%p161) target = $region16
        $region15: #{tpu_custom_call.1} parent=11 // pred_region
          %p164 = scmp.lt.s32.totalorder %s26, 0
          %s165 = scalar_select %p164, %s26, 0
          %s166 = smul.addr %s165, 4
          %s167 = scalar_lea.vmem %s1, %s166
        $region16: #{tpu_custom_call.1} parent=11 // pred_fallthru
          _
        // Predicated region
        $region17: #{tpu_custom_call.1} parent=11 // pred_check
          %p168 = pneg %p116
        $region18: #{tpu_custom_call.1} parent=11 // pred_check_branch
          %170 = sbr.rel (%p168) target = $region20
        $region19: #{tpu_custom_call.1} parent=11 // pred_region
          %p171 = scmp.lt.s32.totalorder %s26, 0
          %s172 = scalar_select %p171, %s26, 0
          %s173 = smul.addr %s172, 4
          %s174 = scalar_lea.vmem %s2, %s173
        $region20: #{tpu_custom_call.1} parent=11 // pred_fallthru
          _
      $region12: #{tpu_custom_call.1} parent=5 // pred_fallthru
        _
      %p175 = scmp.lt.s32.totalorder %s15, 2
      // Predicated region
      $region21: #{tpu_custom_call.1} parent=5 // pred_check
        %p176 = pneg %p175
      $region22: #{tpu_custom_call.1} parent=5 // pred_check_branch
        %178 = sbr.rel (%p176) target = $region24
      $region23: #{tpu_custom_call.1} parent=5 // pred_region
        // Predicated region
        $region25: #{tpu_custom_call.1} parent=23 // pred_check
          %p179 = pneg %p58
        $region26: #{tpu_custom_call.1} parent=23 // pred_check_branch
          %181 = sbr.rel (%p179) target = $region28
        $region27: #{tpu_custom_call.1} parent=23 // pred_region
          %s182 = sand.u32 %s48, 1
          %s183 = scalar_lea.sflag [#allocation3], %s182
          %s184 = sand.u32 %s48, 1
          %s185 = smul.addr %s184, 8
          %s186 = scalar_lea.vmem [#allocation2], %s185
          %s187 = smul.u32 2, %s24
          %s189 = ssub.s32 128, 128
          %190 = vsyncadd %s183, %s189
          %s191 = smul.addr %s23, 2
          %s192 = sadd.s32 %s187, %s191
          %s193 = smul.addr %s22, 2
          %s194 = sadd.s32 %s192, %s193
          %s195 = smul.addr %s194, 64
          %s196 = scalar_lea.hbm %s0, %s195
          %s198 = sshll.u32 %s186, 4
          %s199 = int_to_ptr.vmem [resolvable:$true] %s198
          %201 = dma.hbm_to_vmem [thread:$0]  %s196, 128, %s199, %s183
        $region28: #{tpu_custom_call.1} parent=23 // pred_fallthru
          _
      $region24: #{tpu_custom_call.1} parent=5 // pred_fallthru
        _
      %p202 = scmp.le.s32.totalorder 1, %s15
      %p203 = scmp.lt.s32.totalorder %s15, 3
      %p204 = pnand %p202, %p203
      %p205 = pneg %p204
      // Predicated region
      $region29: #{tpu_custom_call.1} parent=5 // pred_check
        _
      $region30: #{tpu_custom_call.1} parent=5 // pred_check_branch
        %207 = sbr.rel (%p204) target = $region32
      $region31: #{tpu_custom_call.1} parent=5 // pred_region
        %s208 = ssub.s32 %s15, 1
        %s209 = sand.u32 %s51, 1
        %s210 = scalar_lea.sflag [#allocation3], %s209
        %s211 = sand.u32 %s51, 1
        %s212 = smul.addr %s211, 8
        %s213 = scalar_lea.vmem [#allocation2], %s212
        // Predicated region
        $region33: #{tpu_custom_call.1} parent=31 // pred_check
          %p214 = pneg %p64
        $region34: #{tpu_custom_call.1} parent=31 // pred_check_branch
          %216 = sbr.rel (%p214) target = $region36
        $region35: #{tpu_custom_call.1} parent=31 // pred_region
          %217 = dma.done %s210, 128
        $region36: #{tpu_custom_call.1} parent=31 // pred_fallthru
          _
        %s218 = sand.u32 %s51, 1
        %s219 = scalar_lea.sflag [#allocation3], %s218
        %s220 = sand.u32 %s51, 1
        %s221 = smul.addr %s220, 8
        %s222 = scalar_lea.vmem [#allocation2], %s221
        %p223 = pneg %p64
        %p224 = pneg %p61
        %p225 = scmp.lt.s32.totalorder %s26, 0
        %s226 = scalar_select %p225, %s26, 0
        %s227 = smul.addr %s226, 4
        %s228 = scalar_lea.vmem %s1, %s227
        %p229 = pneg %p90
        %p230 = pneg %p87
        %p231 = scmp.lt.s32.totalorder %s26, 0
        %s232 = scalar_select %p231, %s26, 0
        %s233 = smul.addr %s232, 4
        %s234 = scalar_lea.vmem %s2, %s233
        %p235 = pneg %p116
        %p236 = pneg %p113
        %p237 = pneg %p146
        %p238 = pneg %p143
        %s239 = sand.u32 %s133, 1
        %s240 = scalar_lea.sflag [#allocation4], %s239
        %s241 = sand.u32 %s133, 1
        %s242 = smul.addr %s241, 8
        %s243 = scalar_lea.vmem [#allocation5], %s242
        %s244 = smul.u32 2, %s27
        %p245 = scmp.lt.s32.totalorder %s26, 0
        %s246 = scalar_select %p245, %s26, 0
        %s247 = smul.addr %s246, 4
        %s248 = scalar_lea.vmem %s1, %s247
        %p249 = scmp.lt.s32.totalorder %s26, 0
        %s250 = scalar_select %p249, %s26, 0
        %s251 = smul.addr %s250, 4
        %s252 = scalar_lea.vmem %s2, %s251
        %s253 = smul.u32 2, %s27
        %v254 = vld [vmem:[%s248] sm:$0xf]
        %v255 = vld [vmem:[%s252] sm:$0xf]
        %v256 = vld [vmem:[%s213] sm:$0xff]
        %258 = vset.pattern.permute.xlu0 0
        %259 = vperm.xlu0 %258, %v254
        %v260 = vpop.permute.xlu0 %259
        %v262 = vunpack.c.l.s4 839922192
        %v263 = vunpack.c.0.s8 %v262
        %v264 = vlaneseq
        %v265 = vshrl.u32 %v264, 7
        %v266 = vsub.s32 %v263, %v265
        %v267 = vrot.slane %v260, %v266
        %v269 = vmul.f32 %v256, %v267
        %271 = vset.pattern.permute.xlu0 0
        %272 = vperm.xlu0 %271, %v255
        %v273 = vpop.permute.xlu0 %272
        %v275 = vunpack.c.l.s4 839922192
        %v276 = vunpack.c.0.s8 %v275
        %v277 = vlaneseq
        %v278 = vshrl.u32 %v277, 7
        %v279 = vsub.s32 %v276, %v278
        %v280 = vrot.slane %v273, %v279
        %v282 = vadd.f32 %v269, %v280
        %283 = vst [vmem:[%s243] sm:$0xff] %v282
        %s284 = sand.u32 %s133, 1
        %s285 = scalar_lea.sflag [#allocation4], %s284
        %s286 = sand.u32 %s133, 1
        %s287 = smul.addr %s286, 8
        %s288 = scalar_lea.vmem [#allocation5], %s287
        // Predicated region
        $region37: #{tpu_custom_call.1} parent=31 // pred_check
          %p289 = pneg %p143
        $region38: #{tpu_custom_call.1} parent=31 // pred_check_branch
          %291 = sbr.rel (%p289) target = $region40
        $region39: #{tpu_custom_call.1} parent=31 // pred_region
          %s292 = smul.u32 2, %s27
          %s294 = ssub.s32 128, 128
          %295 = vsyncadd %s285, %s294
          %s296 = smul.addr %s26, 2
          %s297 = sadd.s32 %s292, %s296
          %s298 = smul.addr %s25, 2
          %s299 = sadd.s32 %s297, %s298
          %s300 = smul.addr %s299, 64
          %s301 = scalar_lea.hbm %s3, %s300
          %s303 = sshll.u32 %s288, 4
          %s304 = int_to_ptr.vmem [resolvable:$true] %s303
          %306 = dma.vmem_to_hbm [thread:$0]  %s304, 128, %s301, %s285
        $region40: #{tpu_custom_call.1} parent=31 // pred_fallthru
          _
      $region32: #{tpu_custom_call.1} parent=5 // pred_fallthru
        _
      %p307 = scmp.le.s32.totalorder 2, %s15
      // Predicated region
      $region41: #{tpu_custom_call.1} parent=5 // pred_check
        %p308 = pneg %p307
      $region42: #{tpu_custom_call.1} parent=5 // pred_check_branch
        %310 = sbr.rel (%p308) target = $region44
      $region43: #{tpu_custom_call.1} parent=5 // pred_region
        %s311 = ssub.s32 %s15, 2
        // Predicated region
        $region45: #{tpu_custom_call.1} parent=43 // pred_check
          %p312 = pneg %p149
        $region46: #{tpu_custom_call.1} parent=43 // pred_check_branch
          %314 = sbr.rel (%p312) target = $region48
        $region47: #{tpu_custom_call.1} parent=43 // pred_region
          %s315 = sand.u32 %s134, 1
          %s316 = scalar_lea.sflag [#allocation4], %s315
          %s317 = sand.u32 %s134, 1
          %s318 = smul.addr %s317, 8
          %s319 = scalar_lea.vmem [#allocation5], %s318
          %320 = dma.done %s316, 128
        $region48: #{tpu_custom_call.1} parent=43 // pred_fallthru
          _
      $region44: #{tpu_custom_call.1} parent=5 // pred_fallthru
        _
    $region6: #{tpu_custom_call.1} parent=1 // loop_footer
      %s19 = sadd.s32 1, %s15
    $region7: #{tpu_custom_call.1} parent=1 // loop_footer_branch
      %14 = sbr.rel target = $region3
    $region8: #{tpu_custom_call.1} parent=1 // loop_exit
      _
    %321 = vsyncpa [#allocation3], 1
    %s322 = scalar_lea.sflag [#allocation3], 1
    %323 = vsyncpa %s322, 1
    %324 = vsyncpa [#allocation4], 1
    %s325 = scalar_lea.sflag [#allocation4], 1
    %326 = vsyncpa %s325, 1

</llo_original>
